<compile_context>
chip_gen: v7x
topology: tpu7x:2x2x1
jax: 0.10.0
libtpu: 0.0.40
codegen_flags: <defaults>
</compile_context>

<pallas_src>
import functools

import jax
import jax.numpy as jnp
from jax.experimental import pallas as pl
from jax.experimental.pallas import tpu as pltpu  # noqa: F401  (TPU backend; kept for parity)


# ---------------------------------------------------------------------------
# Fused Pallas kernel: conv(im2col matmul)+ReLU -> FC -> VAE reparameterization
# ---------------------------------------------------------------------------

def _fused_encoder_kernel(patches_ref, convw_ref, convb_ref, fcw_ref, fcb_ref,
                          eps_ref, enc_ref, z_ref):
    # Static shapes:
    #   patches_ref: [B*K_pad, P]        bf16  im2col patches, batch-stacked along rows
    #   convw_ref:   [C*B_pad, B*K_pad]  bf16  block-diagonal conv weight (rows = (c, b))
    #   convb_ref:   [C*B_pad, 1]        f32   conv bias (repeated per row group)
    #   fcw_ref:     [C, P, N]           bf16  FC weight regrouped to (c, p) feature order
    #   fcb_ref:     [1, N]              f32
    #   eps_ref:     [B, L]              f32
    #   enc_ref:     [B, N]              f32   raw encoder output (pre mu/log_var split)
    #   z_ref:       [B, L]              f32   reparameterized sample
    n_ch, _, n_out = fcw_ref.shape
    b_pad = convw_ref.shape[0] // n_ch
    b_sz, lat = z_ref.shape

    # ---- Conv as one lane-dense MXU matmul: [C*B_pad, B*K_pad] @ [B*K_pad, P] ----
    conv = jnp.dot(convw_ref[...], patches_ref[...],
                   preferred_element_type=jnp.float32)            # [C*B_pad, P] f32
    conv = jnp.maximum(conv + convb_ref[...], 0.0)                # bias + ReLU (f32)

    # ---- FC head: enc[b, n] = sum_c sum_p conv[(c, b), p] * fcw[c, p, n] ----------
    # Static unroll over the (tiny) channel count: each step is an 8-sublane-aligned
    # [B_pad, P] @ [P, N] MXU matmul accumulated in f32.
    acc = jnp.zeros((b_pad, n_out), jnp.float32)
    for c in range(n_ch):
        x_c = conv[c * b_pad:(c + 1) * b_pad, :].astype(jnp.bfloat16)   # [B_pad, P]
        acc = acc + jnp.dot(x_c, fcw_ref[c],
                            preferred_element_type=jnp.float32)         # [B_pad, N]
    enc = acc[:b_sz, :] + fcb_ref[...]                            # bias added once (hoisted)
    enc_ref[...] = enc

    # ---- VAE reparameterization: z = mu + exp(0.5 * log_var) * eps ---------------
    mu = enc[:, :lat]
    log_var = enc[:, lat:]
    z_ref[...] = mu + jnp.exp(0.5 * log_var) * eps_ref[...]


# ---------------------------------------------------------------------------
# Host-side layout prep (pure glue: im2col + one-time weight re-layouts)
# ---------------------------------------------------------------------------

def _round_up(n, m):
    return ((n + m - 1) // m) * m


def _im2col_stacked(x, kh, kw, stride, pad, k_pad):
    """x: [B,C,H,W] -> patches [B*k_pad, OH*OW]; row index = b*k_pad + (cin*kh*kw + ki*kw + kj)."""
    B, C, H, W = x.shape
    OH = (H + 2 * pad - kh) // stride + 1
    OW = (W + 2 * pad - kw) // stride + 1
    xp = jnp.pad(x, ((0, 0), (0, 0), (pad, pad), (pad, pad)))
    cols = []
    for ki in range(kh):
        for kj in range(kw):
            cols.append(xp[:, :, ki:ki + stride * OH:stride,
                           kj:kj + stride * OW:stride])           # [B, C, OH, OW]
    pat = jnp.stack(cols, axis=2)                                 # [B, C, kh*kw, OH, OW]
    pat = pat.reshape(B, C * kh * kw, OH * OW)                    # [B, K, P] (k = (c,ki,kj))
    pat = jnp.pad(pat, ((0, 0), (0, k_pad - C * kh * kw), (0, 0)))
    return pat.reshape(B * k_pad, OH * OW), OH, OW


def image_encoder_forward(x, params, *, vae=True, training=True, eps=None,
                          stride=2, pad=1):
    """Mirrors ImageEncoder.forward: returns (enc, mu, log_var)."""
    conv_w, conv_b = params["conv_w"], params["conv_b"]
    fc_w, fc_b = params["fc_w"], params["fc_b"]

    B = x.shape[0]
    cout, cin, kh, kw = conv_w.shape
    n_out = fc_w.shape[0]
    assert n_out % 2 == 0, "encoder output width must be even for the VAE split"
    lat = n_out // 2

    if vae and training and eps is None:
        raise ValueError("eps must be provided when vae=True and training=True")
    if eps is None:
        eps = jnp.zeros((B, lat), jnp.float32)

    K = cin * kh * kw
    k_pad = _round_up(K, 64)      # B*k_pad = 128 lanes for B=2: full-vreg contraction dim
    b_pad = _round_up(B, 8)       # 8-sublane-aligned per-channel row groups

    patches, OH, OW = _im2col_stacked(x, kh, kw, stride, pad, k_pad)   # [B*k_pad, P]
    P = OH * OW
    assert fc_w.shape[1] == cout * P, "fc_w must match flattened conv feature size"

    # ---- one-time weight re-layouts (host/XLA side; layout plumbing only) --------
    w_flat = jnp.pad(conv_w.reshape(cout, K), ((0, 0), (0, k_pad - K)))   # [C, k_pad]
    sel = jnp.eye(b_pad, B, dtype=w_flat.dtype)                           # [B_pad, B]
    # block weight: W_blk[c*B_pad + b, d*k_pad + k] = w_flat[c, k] if b == d else 0
    w_blk = jnp.einsum('ck,bd->cbdk', w_flat, sel).reshape(cout * b_pad, B * k_pad)
    b_blk = jnp.repeat(conv_b, b_pad)[:, None].astype(jnp.float32)        # [C*B_pad, 1]
    # fc_w is in torch.flatten(x,1) order (C, OH, OW); regroup to [C, P, N] (no transpose in-kernel)
    fc_w3 = fc_w.reshape(n_out, cout, P).transpose(1, 2, 0)               # [C, P, N]
    fc_b2 = fc_b.reshape(1, n_out).astype(jnp.float32)

    enc_raw, z = pl.pallas_call(
        _fused_encoder_kernel,
        out_shape=(jax.ShapeDtypeStruct((B, n_out), jnp.float32),
                   jax.ShapeDtypeStruct((B, lat), jnp.float32)),
        in_specs=[
            pl.BlockSpec((B * k_pad, P), lambda: (0, 0)),
            pl.BlockSpec((cout * b_pad, B * k_pad), lambda: (0, 0)),
            pl.BlockSpec((cout * b_pad, 1), lambda: (0, 0)),
            pl.BlockSpec((cout, P, n_out), lambda: (0, 0, 0)),
            pl.BlockSpec((1, n_out), lambda: (0, 0)),
            pl.BlockSpec((B, lat), lambda: (0, 0)),
        ],
        out_specs=(pl.BlockSpec((B, n_out), lambda: (0, 0)),
                   pl.BlockSpec((B, lat), lambda: (0, 0))),
    )(patches.astype(jnp.bfloat16),
      w_blk.astype(jnp.bfloat16),
      b_blk,
      fc_w3.astype(jnp.bfloat16),
      fc_b2,
      eps.astype(jnp.float32))

    if vae:
        mu = enc_raw[:, :lat]
        log_var = enc_raw[:, lat:]
        enc = z if training else mu
    else:
        mu, log_var = None, None
        enc = enc_raw
    return enc, mu, log_var


# ---------------------------------------------------------------------------
# Pure-JAX f32 reference (independent path: lax.conv) for correctness checking
# ---------------------------------------------------------------------------

def reference_forward(x, params, eps, *, stride=2, pad=1):
    conv_w, conv_b = params["conv_w"], params["conv_b"]
    fc_w, fc_b = params["fc_w"], params["fc_b"]
    B = x.shape[0]
    y = jax.lax.conv_general_dilated(
        x, conv_w, window_strides=(stride, stride),
        padding=[(pad, pad), (pad, pad)],
        dimension_numbers=('NCHW', 'OIHW', 'NCHW'),
        precision=jax.lax.Precision.HIGHEST)
    y = jnp.maximum(y + conv_b[None, :, None, None], 0.0)
    feat = y.reshape(B, -1)                       # torch.flatten(x, 1): (C, H, W) order
    enc = jnp.dot(feat, fc_w.T, precision=jax.lax.Precision.HIGHEST) + fc_b
    lat = fc_w.shape[0] // 2
    mu, log_var = enc[:, :lat], enc[:, lat:]
    z = mu + jnp.exp(0.5 * log_var) * eps
    return z, mu, log_var


# ---------------------------------------------------------------------------
# Parameter init (deterministic, synthetic) + driver
# ---------------------------------------------------------------------------

def init_params(key, cin=4, cout=8, kh=3, kw=3, feat_dim=8 * 8 * 8, out_dim=32):
    k1, k2, k3, k4 = jax.random.split(key, 4)
    return {
        "conv_w": 0.1 * jax.random.normal(k1, (cout, cin, kh, kw), jnp.float32),
        "conv_b": 0.1 * jax.random.normal(k2, (cout,), jnp.float32),
        "fc_w":   0.05 * jax.random.normal(k3, (out_dim, feat_dim), jnp.float32),
        "fc_b":   0.05 * jax.random.normal(k4, (out_dim,), jnp.float32),
    }


if __name__ == "__main__":
    key = jax.random.PRNGKey(0)
    kx, kp, ke = jax.random.split(key, 3)

    B, C, H, W = 2, 4, 16, 16           # NCHW, as in PyTorch
    latent = 16                         # enc has 2*latent channels -> mu/log_var split
    x = jax.random.normal(kx, (B, C, H, W), jnp.float32)
    params = init_params(kp, cin=C, cout=8, kh=3, kw=3,
                         feat_dim=8 * (H // 2) * (W // 2), out_dim=2 * latent)
    eps = jax.random.normal(ke, (B, latent), jnp.float32)

    fwd = jax.jit(image_encoder_forward, static_argnames=("vae", "training"))
    enc, mu, log_var = fwd(x, params, vae=True, training=True, eps=eps)
    jax.block_until_ready((enc, mu, log_var))

    assert enc.shape == (B, latent)
    assert mu.shape == (B, latent) and log_var.shape == (B, latent)

    # Correctness check against an independent f32 XLA reference (bf16 MXU tolerance).
    z_ref, mu_ref, lv_ref = reference_forward(x, params, eps)
    assert jnp.allclose(mu, mu_ref, atol=3e-2, rtol=3e-2)
    assert jnp.allclose(log_var, lv_ref, atol=3e-2, rtol=3e-2)
    assert jnp.allclose(enc, z_ref, atol=5e-2, rtol=5e-2)

    print("KERNEL_OK")
</pallas_src>

<mosaic_0001>
module attributes {stable_mosaic.version = 11 : i64} {
  func.func @_fused_encoder_kernel(%arg0: memref<128x64xbf16, #tpu.memory_space<vmem>>, %arg1: memref<64x128xbf16, #tpu.memory_space<vmem>>, %arg2: memref<64x1xf32, #tpu.memory_space<vmem>>, %arg3: memref<8x64x32xbf16, #tpu.memory_space<vmem>>, %arg4: memref<1x32xf32, #tpu.memory_space<vmem>>, %arg5: memref<2x16xf32, #tpu.memory_space<vmem>>, %arg6: memref<2x32xf32, #tpu.memory_space<vmem>>, %arg7: memref<2x16xf32, #tpu.memory_space<vmem>>) attributes {dimension_semantics = [], scalar_prefetch = 0 : i64, scratch_operands = 0 : i64, tpu.core_type = #tpu.core_type<tc>} {
    %c0 = arith.constant 0 : index
    %c0_0 = arith.constant 0 : index
    %0 = vector.load %arg1[%c0, %c0_0] : memref<64x128xbf16, #tpu.memory_space<vmem>>, vector<64x128xbf16>
    %c0_1 = arith.constant 0 : index
    %c0_2 = arith.constant 0 : index
    %1 = vector.load %arg0[%c0_1, %c0_2] : memref<128x64xbf16, #tpu.memory_space<vmem>>, vector<128x64xbf16>
    %cst = arith.constant dense<0.000000e+00> : vector<64x64xf32>
    %2 = tpu.matmul %0, %1, %cst {dimension_numbers = #tpu.dot_dimension_numbers<[1], [0], [0], [1], [0, 0, 1, 1], [], []>} : vector<64x128xbf16>, vector<128x64xbf16>, vector<64x64xf32> -> vector<64x64xf32>
    %c0_3 = arith.constant 0 : index
    %c0_4 = arith.constant 0 : index
    %3 = vector.load %arg2[%c0_3, %c0_4] : memref<64x1xf32, #tpu.memory_space<vmem>>, vector<64x1xf32>
    %4 = vector.broadcast %3 : vector<64x1xf32> to vector<64x64xf32>
    %5 = arith.addf %2, %4 : vector<64x64xf32>
    %cst_5 = arith.constant 0.000000e+00 : f32
    %6 = vector.broadcast %cst_5 : f32 to vector<64x64xf32>
    %7 = arith.maximumf %5, %6 : vector<64x64xf32>
    %cst_6 = arith.constant 0.000000e+00 : f32
    %8 = vector.broadcast %cst_6 : f32 to vector<8x32xf32>
    %9 = vector.extract_strided_slice %7 {offsets = [0, 0], sizes = [8, 64], strides = [1, 1]} : vector<64x64xf32> to vector<8x64xf32>
    %10 = arith.truncf %9 : vector<8x64xf32> to vector<8x64xbf16>
    %c0_7 = arith.constant 0 : index
    %c0_8 = arith.constant 0 : index
    %c0_9 = arith.constant 0 : index
    %11 = vector.load %arg3[%c0_7, %c0_8, %c0_9] : memref<8x64x32xbf16, #tpu.memory_space<vmem>>, vector<1x64x32xbf16>
    %12 = vector.shape_cast %11 : vector<1x64x32xbf16> to vector<64x32xbf16>
    %cst_10 = arith.constant dense<0.000000e+00> : vector<8x32xf32>
    %13 = tpu.matmul %10, %12, %cst_10 {dimension_numbers = #tpu.dot_dimension_numbers<[1], [0], [0], [1], [0, 0, 1, 1], [], []>} : vector<8x64xbf16>, vector<64x32xbf16>, vector<8x32xf32> -> vector<8x32xf32>
    %14 = arith.addf %8, %13 : vector<8x32xf32>
    %15 = vector.extract_strided_slice %7 {offsets = [8, 0], sizes = [8, 64], strides = [1, 1]} : vector<64x64xf32> to vector<8x64xf32>
    %16 = arith.truncf %15 : vector<8x64xf32> to vector<8x64xbf16>
    %c1 = arith.constant 1 : index
    %c0_11 = arith.constant 0 : index
    %c0_12 = arith.constant 0 : index
    %17 = vector.load %arg3[%c1, %c0_11, %c0_12] : memref<8x64x32xbf16, #tpu.memory_space<vmem>>, vector<1x64x32xbf16>
    %18 = vector.shape_cast %17 : vector<1x64x32xbf16> to vector<64x32xbf16>
    %cst_13 = arith.constant dense<0.000000e+00> : vector<8x32xf32>
    %19 = tpu.matmul %16, %18, %cst_13 {dimension_numbers = #tpu.dot_dimension_numbers<[1], [0], [0], [1], [0, 0, 1, 1], [], []>} : vector<8x64xbf16>, vector<64x32xbf16>, vector<8x32xf32> -> vector<8x32xf32>
    %20 = arith.addf %14, %19 : vector<8x32xf32>
    %21 = vector.extract_strided_slice %7 {offsets = [16, 0], sizes = [8, 64], strides = [1, 1]} : vector<64x64xf32> to vector<8x64xf32>
    %22 = arith.truncf %21 : vector<8x64xf32> to vector<8x64xbf16>
    %c2 = arith.constant 2 : index
    %c0_14 = arith.constant 0 : index
    %c0_15 = arith.constant 0 : index
    %23 = vector.load %arg3[%c2, %c0_14, %c0_15] : memref<8x64x32xbf16, #tpu.memory_space<vmem>>, vector<1x64x32xbf16>
    %24 = vector.shape_cast %23 : vector<1x64x32xbf16> to vector<64x32xbf16>
    %cst_16 = arith.constant dense<0.000000e+00> : vector<8x32xf32>
    %25 = tpu.matmul %22, %24, %cst_16 {dimension_numbers = #tpu.dot_dimension_numbers<[1], [0], [0], [1], [0, 0, 1, 1], [], []>} : vector<8x64xbf16>, vector<64x32xbf16>, vector<8x32xf32> -> vector<8x32xf32>
    %26 = arith.addf %20, %25 : vector<8x32xf32>
    %27 = vector.extract_strided_slice %7 {offsets = [24, 0], sizes = [8, 64], strides = [1, 1]} : vector<64x64xf32> to vector<8x64xf32>
    %28 = arith.truncf %27 : vector<8x64xf32> to vector<8x64xbf16>
    %c3 = arith.constant 3 : index
    %c0_17 = arith.constant 0 : index
    %c0_18 = arith.constant 0 : index
    %29 = vector.load %arg3[%c3, %c0_17, %c0_18] : memref<8x64x32xbf16, #tpu.memory_space<vmem>>, vector<1x64x32xbf16>
    %30 = vector.shape_cast %29 : vector<1x64x32xbf16> to vector<64x32xbf16>
    %cst_19 = arith.constant dense<0.000000e+00> : vector<8x32xf32>
    %31 = tpu.matmul %28, %30, %cst_19 {dimension_numbers = #tpu.dot_dimension_numbers<[1], [0], [0], [1], [0, 0, 1, 1], [], []>} : vector<8x64xbf16>, vector<64x32xbf16>, vector<8x32xf32> -> vector<8x32xf32>
    %32 = arith.addf %26, %31 : vector<8x32xf32>
    %33 = vector.extract_strided_slice %7 {offsets = [32, 0], sizes = [8, 64], strides = [1, 1]} : vector<64x64xf32> to vector<8x64xf32>
    %34 = arith.truncf %33 : vector<8x64xf32> to vector<8x64xbf16>
    %c4 = arith.constant 4 : index
    %c0_20 = arith.constant 0 : index
    %c0_21 = arith.constant 0 : index
    %35 = vector.load %arg3[%c4, %c0_20, %c0_21] : memref<8x64x32xbf16, #tpu.memory_space<vmem>>, vector<1x64x32xbf16>
    %36 = vector.shape_cast %35 : vector<1x64x32xbf16> to vector<64x32xbf16>
    %cst_22 = arith.constant dense<0.000000e+00> : vector<8x32xf32>
    %37 = tpu.matmul %34, %36, %cst_22 {dimension_numbers = #tpu.dot_dimension_numbers<[1], [0], [0], [1], [0, 0, 1, 1], [], []>} : vector<8x64xbf16>, vector<64x32xbf16>, vector<8x32xf32> -> vector<8x32xf32>
    %38 = arith.addf %32, %37 : vector<8x32xf32>
    %39 = vector.extract_strided_slice %7 {offsets = [40, 0], sizes = [8, 64], strides = [1, 1]} : vector<64x64xf32> to vector<8x64xf32>
    %40 = arith.truncf %39 : vector<8x64xf32> to vector<8x64xbf16>
    %c5 = arith.constant 5 : index
    %c0_23 = arith.constant 0 : index
    %c0_24 = arith.constant 0 : index
    %41 = vector.load %arg3[%c5, %c0_23, %c0_24] : memref<8x64x32xbf16, #tpu.memory_space<vmem>>, vector<1x64x32xbf16>
    %42 = vector.shape_cast %41 : vector<1x64x32xbf16> to vector<64x32xbf16>
    %cst_25 = arith.constant dense<0.000000e+00> : vector<8x32xf32>
    %43 = tpu.matmul %40, %42, %cst_25 {dimension_numbers = #tpu.dot_dimension_numbers<[1], [0], [0], [1], [0, 0, 1, 1], [], []>} : vector<8x64xbf16>, vector<64x32xbf16>, vector<8x32xf32> -> vector<8x32xf32>
    %44 = arith.addf %38, %43 : vector<8x32xf32>
    %45 = vector.extract_strided_slice %7 {offsets = [48, 0], sizes = [8, 64], strides = [1, 1]} : vector<64x64xf32> to vector<8x64xf32>
    %46 = arith.truncf %45 : vector<8x64xf32> to vector<8x64xbf16>
    %c6 = arith.constant 6 : index
    %c0_26 = arith.constant 0 : index
    %c0_27 = arith.constant 0 : index
    %47 = vector.load %arg3[%c6, %c0_26, %c0_27] : memref<8x64x32xbf16, #tpu.memory_space<vmem>>, vector<1x64x32xbf16>
    %48 = vector.shape_cast %47 : vector<1x64x32xbf16> to vector<64x32xbf16>
    %cst_28 = arith.constant dense<0.000000e+00> : vector<8x32xf32>
    %49 = tpu.matmul %46, %48, %cst_28 {dimension_numbers = #tpu.dot_dimension_numbers<[1], [0], [0], [1], [0, 0, 1, 1], [], []>} : vector<8x64xbf16>, vector<64x32xbf16>, vector<8x32xf32> -> vector<8x32xf32>
    %50 = arith.addf %44, %49 : vector<8x32xf32>
    %51 = vector.extract_strided_slice %7 {offsets = [56, 0], sizes = [8, 64], strides = [1, 1]} : vector<64x64xf32> to vector<8x64xf32>
    %52 = arith.truncf %51 : vector<8x64xf32> to vector<8x64xbf16>
    %c7 = arith.constant 7 : index
    %c0_29 = arith.constant 0 : index
    %c0_30 = arith.constant 0 : index
    %53 = vector.load %arg3[%c7, %c0_29, %c0_30] : memref<8x64x32xbf16, #tpu.memory_space<vmem>>, vector<1x64x32xbf16>
    %54 = vector.shape_cast %53 : vector<1x64x32xbf16> to vector<64x32xbf16>
    %cst_31 = arith.constant dense<0.000000e+00> : vector<8x32xf32>
    %55 = tpu.matmul %52, %54, %cst_31 {dimension_numbers = #tpu.dot_dimension_numbers<[1], [0], [0], [1], [0, 0, 1, 1], [], []>} : vector<8x64xbf16>, vector<64x32xbf16>, vector<8x32xf32> -> vector<8x32xf32>
    %56 = arith.addf %50, %55 : vector<8x32xf32>
    %57 = vector.extract_strided_slice %56 {offsets = [0, 0], sizes = [2, 32], strides = [1, 1]} : vector<8x32xf32> to vector<2x32xf32>
    %c0_32 = arith.constant 0 : index
    %c0_33 = arith.constant 0 : index
    %58 = vector.load %arg4[%c0_32, %c0_33] : memref<1x32xf32, #tpu.memory_space<vmem>>, vector<1x32xf32>
    %59 = vector.broadcast %58 : vector<1x32xf32> to vector<2x32xf32>
    %60 = arith.addf %57, %59 : vector<2x32xf32>
    %c0_34 = arith.constant 0 : index
    %c0_35 = arith.constant 0 : index
    %61 = vector.load %arg6[%c0_34, %c0_35] : memref<2x32xf32, #tpu.memory_space<vmem>>, vector<2x32xf32>
    tpu.vector_store %arg6[%c0_34, %c0_35], %60 {strides = array<i32>} : memref<2x32xf32, #tpu.memory_space<vmem>>, vector<2x32xf32>,
    %62 = vector.extract_strided_slice %60 {offsets = [0, 0], sizes = [2, 16], strides = [1, 1]} : vector<2x32xf32> to vector<2x16xf32>
    %63 = vector.extract_strided_slice %60 {offsets = [0, 16], sizes = [2, 16], strides = [1, 1]} : vector<2x32xf32> to vector<2x16xf32>
    %cst_36 = arith.constant 5.000000e-01 : f32
    %64 = vector.broadcast %cst_36 : f32 to vector<2x16xf32>
    %65 = arith.mulf %64, %63 : vector<2x16xf32>
    %66 = math.exp %65 : vector<2x16xf32>
    %c0_37 = arith.constant 0 : index
    %c0_38 = arith.constant 0 : index
    %67 = vector.load %arg5[%c0_37, %c0_38] : memref<2x16xf32, #tpu.memory_space<vmem>>, vector<2x16xf32>
    %68 = arith.mulf %66, %67 : vector<2x16xf32>
    %69 = arith.addf %62, %68 : vector<2x16xf32>
    %c0_39 = arith.constant 0 : index
    %c0_40 = arith.constant 0 : index
    %70 = vector.load %arg7[%c0_39, %c0_40] : memref<2x16xf32, #tpu.memory_space<vmem>>, vector<2x16xf32>
    tpu.vector_store %arg7[%c0_39, %c0_40], %69 {strides = array<i32>} : memref<2x16xf32, #tpu.memory_space<vmem>>, vector<2x16xf32>,
    return
  }
}

</mosaic_0001>

<llo_original>
// kernel: image_encoder_forward.1
$region0: #{image_encoder_forward.1}
  #allocation0 [shape = 'u32[]', space=smem, size = 0x4, offset = 0x4, fixed_abs, tag = 'smem constant byte address 0x4 - core index']
  #allocation1 [shape = 'u32[144,128]{1,0:T(1,128)}', space=vmem, size = 0x12000, scoped, tag = 'internal scratch']
  %s0 = inlined_call_operand.vmem [shape: bf16[128,64], index: 0, kind: input, shape index: {}]
  %s1 = inlined_call_operand.vmem [shape: bf16[64,128], index: 1, kind: input, shape index: {}]
  %s2 = inlined_call_operand.vmem [shape: f32[64,1], index: 2, kind: input, shape index: {}]
  %s3 = inlined_call_operand.vmem [shape: bf16[8,64,32], index: 3, kind: input, shape index: {}]
  %s4 = inlined_call_operand.vmem [shape: f32[1,32], index: 4, kind: input, shape index: {}]
  %s5 = inlined_call_operand.vmem [shape: f32[2,16], index: 5, kind: input, shape index: {}]
  %s6 = inlined_call_operand.vmem [shape: f32[2,32], index: 6, kind: output, shape index: {0}]
  %s7 = inlined_call_operand.hbm [shape: f32[2,16], index: 7, kind: output, shape index: {1}]
  %8 = xla_tuple %s6, %s7
  %s9 = sld [smem:[#allocation0]]
  $region42: #{image_encoder_forward.1} parent=0
    _
  %s11 = ssub.s32 1, %s9
  %s12 = scalar_select 0, %s11, %s9
  $region1: #{image_encoder_forward.1} parent=0
    #allocation2 [shape = 'u8[1024]{0}', space=vmem, size = 0x400, scoped, tag = 'output window, operand 1, single buffered']
    #allocation3 [shape = 's32[1]{0}', space=sflag, size = 0x4, scoped, tag = 'scoped memory for image_encoder_forward.1']
    %13 = vsyncpa [#allocation3], 0
    // Predicated region
    $region2: #{image_encoder_forward.1} parent=1 // pred_check
      _
    $region3: #{image_encoder_forward.1} parent=1 // pred_check_branch
      %15 = sbr.rel (0) target = $region5
    $region4: #{image_encoder_forward.1} parent=1 // pred_region
      _
    $region5: #{image_encoder_forward.1} parent=1 // pred_fallthru
      _
    // Predicated region
    $region6: #{image_encoder_forward.1} parent=1 // pred_check
      _
    $region7: #{image_encoder_forward.1} parent=1 // pred_check_branch
      %17 = sbr.rel (0) target = $region9
    $region8: #{image_encoder_forward.1} parent=1 // pred_region
      _
    $region9: #{image_encoder_forward.1} parent=1 // pred_fallthru
      _
    // Predicated region
    $region10: #{image_encoder_forward.1} parent=1 // pred_check
      _
    $region11: #{image_encoder_forward.1} parent=1 // pred_check_branch
      %19 = sbr.rel (0) target = $region13
    $region12: #{image_encoder_forward.1} parent=1 // pred_region
      _
    $region13: #{image_encoder_forward.1} parent=1 // pred_fallthru
      _
    // Predicated region
    $region14: #{image_encoder_forward.1} parent=1 // pred_check
      _
    $region15: #{image_encoder_forward.1} parent=1 // pred_check_branch
      %21 = sbr.rel (0) target = $region17
    $region16: #{image_encoder_forward.1} parent=1 // pred_region
      _
    $region17: #{image_encoder_forward.1} parent=1 // pred_fallthru
      _
    // Predicated region
    $region18: #{image_encoder_forward.1} parent=1 // pred_check
      _
    $region19: #{image_encoder_forward.1} parent=1 // pred_check_branch
      %23 = sbr.rel (0) target = $region21
    $region20: #{image_encoder_forward.1} parent=1 // pred_region
      _
    $region21: #{image_encoder_forward.1} parent=1 // pred_fallthru
      _
    // Predicated region
    $region22: #{image_encoder_forward.1} parent=1 // pred_check
      _
    $region23: #{image_encoder_forward.1} parent=1 // pred_check_branch
      %25 = sbr.rel (0) target = $region25
    $region24: #{image_encoder_forward.1} parent=1 // pred_region
      _
    $region25: #{image_encoder_forward.1} parent=1 // pred_fallthru
      _
    %v27 = vld [vmem:[%s1] sm:$0xf]
    %v28 = vld [vmem:[%s1 + $0x4] sm:$0xf]
    %v29 = vld [vmem:[%s1 + $0x8] sm:$0xf]
    %v30 = vld [vmem:[%s1 + $0xc] sm:$0xf]
    %v31 = vld [vmem:[%s1 + $0x10] sm:$0xf]
    %v32 = vld [vmem:[%s1 + $0x14] sm:$0xf]
    %v33 = vld [vmem:[%s1 + $0x18] sm:$0xf]
    %v34 = vld [vmem:[%s1 + $0x1c] sm:$0xf]
    %v35 = vld [vmem:[%s0] sm:$0xf]
    %v36 = vld [vmem:[%s0 + $0x4] sm:$0xf]
    %v37 = vld [vmem:[%s0 + $0x8] sm:$0xf]
    %v38 = vld [vmem:[%s0 + $0xc] sm:$0xf]
    %v39 = vld [vmem:[%s0 + $0x10] sm:$0xf]
    %v40 = vld [vmem:[%s0 + $0x14] sm:$0xf]
    %v41 = vld [vmem:[%s0 + $0x18] sm:$0xf]
    %v42 = vld [vmem:[%s0 + $0x1c] sm:$0xf]
    %v43 = vld [vmem:[%s0 + $0x20] sm:$0xf]
    %v44 = vld [vmem:[%s0 + $0x24] sm:$0xf]
    %v45 = vld [vmem:[%s0 + $0x28] sm:$0xf]
    %v46 = vld [vmem:[%s0 + $0x2c] sm:$0xf]
    %v47 = vld [vmem:[%s0 + $0x30] sm:$0xf]
    %v48 = vld [vmem:[%s0 + $0x34] sm:$0xf]
    %v49 = vld [vmem:[%s0 + $0x38] sm:$0xf]
    %v50 = vld [vmem:[%s0 + $0x3c] sm:$0xf]
    %v51 = vld [vmem:[%s2] sm:$0xff]
    %v52 = vld [vmem:[%s2 + $0x8] sm:$0xff]
    %v53 = vld [vmem:[%s2 + $0x10] sm:$0xff]
    %v54 = vld [vmem:[%s2 + $0x18] sm:$0xff]
    %v55 = vld [vmem:[%s2 + $0x20] sm:$0xff]
    %v56 = vld [vmem:[%s2 + $0x28] sm:$0xff]
    %v57 = vld [vmem:[%s2 + $0x30] sm:$0xff]
    %v58 = vld [vmem:[%s2 + $0x38] sm:$0xff]
    %60 = vset.pattern.permute.xlu0 0
    %61 = vperm.xlu0 %60, %v51
    %v62 = vpop.permute.xlu0 %61
    %65 = vset.pattern.permute.xlu0 0
    %66 = vperm.xlu0 %65, %v52
    %v67 = vpop.permute.xlu0 %66
    %70 = vset.pattern.permute.xlu0 0
    %71 = vperm.xlu0 %70, %v53
    %v72 = vpop.permute.xlu0 %71
    %75 = vset.pattern.permute.xlu0 0
    %76 = vperm.xlu0 %75, %v54
    %v77 = vpop.permute.xlu0 %76
    %80 = vset.pattern.permute.xlu0 0
    %81 = vperm.xlu0 %80, %v55
    %v82 = vpop.permute.xlu0 %81
    %85 = vset.pattern.permute.xlu0 0
    %86 = vperm.xlu0 %85, %v56
    %v87 = vpop.permute.xlu0 %86
    %90 = vset.pattern.permute.xlu0 0
    %91 = vperm.xlu0 %90, %v57
    %v92 = vpop.permute.xlu0 %91
    %95 = vset.pattern.permute.xlu0 0
    %96 = vperm.xlu0 %95, %v58
    %v97 = vpop.permute.xlu0 %96
    %v107 = vunpack.c.l.b16 %v27
    %v108 = vunpack.c.l.b16 %v28
    %v109 = vunpack.c.l.b16 %v29
    %v110 = vunpack.c.l.b16 %v30
    %v111 = vunpack.c.l.b16 %v31
    %v112 = vunpack.c.l.b16 %v32
    %v113 = vunpack.c.l.b16 %v33
    %v114 = vunpack.c.l.b16 %v34
    %v115 = vpack.c.b16 %v108, %v107
    %v116 = vpack.c.b16 %v110, %v109
    %v117 = vpack.c.b16 %v112, %v111
    %v118 = vpack.c.b16 %v114, %v113
    %v139 = vunpack.c.l.b16 %v35
    %v140 = vunpack.c.l.b16 %v36
    %v141 = vunpack.c.l.b16 %v37
    %v142 = vunpack.c.l.b16 %v38
    %v143 = vunpack.c.l.b16 %v39
    %v144 = vunpack.c.l.b16 %v40
    %v145 = vunpack.c.l.b16 %v41
    %v146 = vunpack.c.l.b16 %v42
    %v147 = vunpack.c.l.b16 %v43
    %v148 = vunpack.c.l.b16 %v44
    %v149 = vunpack.c.l.b16 %v45
    %v150 = vunpack.c.l.b16 %v46
    %v151 = vunpack.c.l.b16 %v47
    %v152 = vunpack.c.l.b16 %v48
    %v153 = vunpack.c.l.b16 %v49
    %v154 = vunpack.c.l.b16 %v50
    %v155 = vpack.c.b16 %v140, %v139
    %v156 = vpack.c.b16 %v142, %v141
    %v157 = vpack.c.b16 %v144, %v143
    %v158 = vpack.c.b16 %v146, %v145
    %v159 = vpack.c.b16 %v148, %v147
    %v160 = vpack.c.b16 %v150, %v149
    %v161 = vpack.c.b16 %v152, %v151
    %v162 = vpack.c.b16 %v154, %v153
    %171 = vmatprep.subr.bf16.mxu0 0
    %172 = vmatpush1.bf16.msra.mxu0 %v155
    %173 = vmatprep.subr.bf16.mxu0 0
    %174 = vmatpush1.bf16.msra.mxu0 %v156
    %175 = vmatprep.subr.bf16.mxu0 0
    %176 = vmatpush1.bf16.msra.mxu0 %v157
    %177 = vmatprep.subr.bf16.mxu0 0
    %178 = vmatpush1.bf16.msra.mxu0 %v158
    %179 = vmatprep.subr.bf16.mxu0 0
    %180 = vmatpush1.bf16.msra.mxu0 %v159
    %181 = vmatprep.subr.bf16.mxu0 0
    %182 = vmatpush1.bf16.msra.mxu0 %v160
    %183 = vmatprep.subr.bf16.mxu0 0
    %184 = vmatpush1.bf16.msra.mxu0 %v161
    %185 = vmatprep.subr.bf16.mxu0 0
    %186 = vmatpush1.bf16.msra.mxu0 %v162
    %187 = vmatprep.subr.bf16.mxu0 0
    %188 = vmatpush1.bf16.msra.mxu0 0
    %189 = vmatprep.subr.bf16.mxu0 0
    %190 = vmatpush1.bf16.msra.mxu0 0
    %191 = vmatprep.subr.bf16.mxu0 0
    %192 = vmatpush1.bf16.msra.mxu0 0
    %193 = vmatprep.subr.bf16.mxu0 0
    %194 = vmatpush1.bf16.msra.mxu0 0
    %195 = vmatprep.subr.bf16.mxu0 0
    %196 = vmatpush1.bf16.msra.mxu0 0
    %197 = vmatprep.subr.bf16.mxu0 0
    %198 = vmatpush1.bf16.msra.mxu0 0
    %199 = vmatprep.subr.bf16.mxu0 0
    %200 = vmatpush1.bf16.msra.mxu0 0
    %201 = vmatprep.subr.bf16.mxu0 0
    %202 = vmatpush1.bf16.msra.mxu0 0
    %203 = vmatprep.mubr.bf16.mxu0 0
    %204 = vmatmul.mubr.bf16.gmra.mrb[0].mxu0 %v115
    %v205 = vpop.f32.mrb[0].mxu0
    %v206 = vadd.f32 %v62, %v205
    %v207 = vpop.f32.mrb[0].mxu0
    %v208 = vpop.f32.mrb[0].mxu0
    %v209 = vadd.f32 %v67, %v208
    %v210 = vpop.f32.mrb[0].mxu0
    %211 = vmatprep.mubr.bf16.mxu0 0
    %212 = vmatmul.mubr.bf16.gmra.mrb[0].mxu0 %v116
    %v213 = vpop.f32.mrb[0].mxu0
    %v214 = vadd.f32 %v72, %v213
    %v215 = vpop.f32.mrb[0].mxu0
    %v216 = vpop.f32.mrb[0].mxu0
    %v217 = vadd.f32 %v77, %v216
    %v218 = vpop.f32.mrb[0].mxu0
    %219 = vmatprep.mubr.bf16.mxu0 0
    %220 = vmatmul.mubr.bf16.gmra.mrb[0].mxu0 %v117
    %v221 = vpop.f32.mrb[0].mxu0
    %v222 = vadd.f32 %v82, %v221
    %v223 = vpop.f32.mrb[0].mxu0
    %v224 = vpop.f32.mrb[0].mxu0
    %v225 = vadd.f32 %v87, %v224
    %v226 = vpop.f32.mrb[0].mxu0
    %227 = vmatprep.mubr.bf16.mxu0 0
    %228 = vmatmul.mubr.bf16.gmra.mrb[0].mxu0 %v118
    %v229 = vpop.f32.mrb[0].mxu0
    %v230 = vadd.f32 %v92, %v229
    %v231 = vpop.f32.mrb[0].mxu0
    %v232 = vpop.f32.mrb[0].mxu0
    %v233 = vadd.f32 %v97, %v232
    %v234 = vpop.f32.mrb[0].mxu0
    %235 = vdwg.mxu0
    %v236 = vmax.f32 %v206, 0.0
    %v237 = vmax.f32 %v209, 0.0
    %v238 = vmax.f32 %v214, 0.0
    %v239 = vmax.f32 %v217, 0.0
    %v240 = vmax.f32 %v222, 0.0
    %v241 = vmax.f32 %v225, 0.0
    %v242 = vmax.f32 %v230, 0.0
    %v243 = vmax.f32 %v233, 0.0
    %v244 = vpack.c.bf16 %v236, %v236
    %v245 = vld [vmem:[%s3] sm:$0xf]
    %v246 = vld [vmem:[%s3 + $0x4] sm:$0xf]
    %v247 = vld [vmem:[%s3 + $0x8] sm:$0xf]
    %v248 = vld [vmem:[%s3 + $0xc] sm:$0xf]
    %v249 = vld [vmem:[%s3 + $0x10] sm:$0xf]
    %v250 = vld [vmem:[%s3 + $0x14] sm:$0xf]
    %v251 = vld [vmem:[%s3 + $0x18] sm:$0xf]
    %v252 = vld [vmem:[%s3 + $0x1c] sm:$0xf]
    %v253 = vpack.c.bf16 %v237, %v237
    %s254 = scalar_lea.vmem %s3, 32
    %v255 = vld [vmem:[%s254] sm:$0xf]
    %v256 = vld [vmem:[%s254 + $0x4] sm:$0xf]
    %v257 = vld [vmem:[%s254 + $0x8] sm:$0xf]
    %v258 = vld [vmem:[%s254 + $0xc] sm:$0xf]
    %v259 = vld [vmem:[%s254 + $0x10] sm:$0xf]
    %v260 = vld [vmem:[%s254 + $0x14] sm:$0xf]
    %v261 = vld [vmem:[%s254 + $0x18] sm:$0xf]
    %v262 = vld [vmem:[%s254 + $0x1c] sm:$0xf]
    %v271 = vunpack.c.l.b16 %v255
    %v272 = vunpack.c.l.b16 %v256
    %v273 = vunpack.c.l.b16 %v257
    %v274 = vunpack.c.l.b16 %v258
    %v275 = vunpack.c.l.b16 %v259
    %v276 = vunpack.c.l.b16 %v260
    %v277 = vunpack.c.l.b16 %v261
    %v278 = vunpack.c.l.b16 %v262
    %v279 = vpack.c.b16 %v272, %v271
    %v280 = vpack.c.b16 %v274, %v273
    %v281 = vpack.c.b16 %v276, %v275
    %v282 = vpack.c.b16 %v278, %v277
    %vm287 = vcmask 523264
    %v289 = vsel %vm287, %v253, 0
    %291 = vmatprep.subr.bf16.mxu0 0
    %292 = vmatpush1.bf16.msra.mxu0 %v279
    %293 = vmatprep.subr.bf16.mxu0 0
    %294 = vmatpush1.bf16.msra.mxu0 %v280
    %295 = vmatprep.subr.bf16.mxu0 0
    %296 = vmatpush1.bf16.msra.mxu0 %v281
    %297 = vmatprep.subr.bf16.mxu0 0
    %298 = vmatpush1.bf16.msra.mxu0 %v282
    %299 = vmatprep.subr.bf16.mxu0 0
    %300 = vmatpush1.bf16.msra.mxu0 0
    %301 = vmatprep.subr.bf16.mxu0 0
    %302 = vmatpush1.bf16.msra.mxu0 0
    %303 = vmatprep.subr.bf16.mxu0 0
    %304 = vmatpush1.bf16.msra.mxu0 0
    %305 = vmatprep.subr.bf16.mxu0 0
    %306 = vmatpush1.bf16.msra.mxu0 0
    %307 = vmatprep.subr.bf16.mxu0 0
    %308 = vmatpush1.bf16.msra.mxu0 0
    %309 = vmatprep.subr.bf16.mxu0 0
    %310 = vmatpush1.bf16.msra.mxu0 0
    %311 = vmatprep.subr.bf16.mxu0 0
    %312 = vmatpush1.bf16.msra.mxu0 0
    %313 = vmatprep.subr.bf16.mxu0 0
    %314 = vmatpush1.bf16.msra.mxu0 0
    %315 = vmatprep.subr.bf16.mxu0 0
    %316 = vmatpush1.bf16.msra.mxu0 0
    %317 = vmatprep.subr.bf16.mxu0 0
    %318 = vmatpush1.bf16.msra.mxu0 0
    %319 = vmatprep.subr.bf16.mxu0 0
    %320 = vmatpush1.bf16.msra.mxu0 0
    %321 = vmatprep.subr.bf16.mxu0 0
    %322 = vmatpush1.bf16.msra.mxu0 0
    %323 = vmatprep.mubr.bf16.mxu0 0
    %324 = vmatmul.mubr.bf16.gmra.mrb[0].mxu0 %v289
    %v325 = vpop.f32.mrb[0].mxu0
    %v326 = vadd.f32 0.0, %v325
    %v327 = vpop.f32.mrb[0].mxu0
    %v328 = vpop.f32.mrb[0].mxu0
    %v329 = vpop.f32.mrb[0].mxu0
    %330 = vdwg.mxu0
    %v339 = vunpack.c.l.b16 %v245
    %v340 = vunpack.c.l.b16 %v246
    %v341 = vunpack.c.l.b16 %v247
    %v342 = vunpack.c.l.b16 %v248
    %v343 = vunpack.c.l.b16 %v249
    %v344 = vunpack.c.l.b16 %v250
    %v345 = vunpack.c.l.b16 %v251
    %v346 = vunpack.c.l.b16 %v252
    %v347 = vpack.c.b16 %v340, %v339
    %v348 = vpack.c.b16 %v342, %v341
    %v349 = vpack.c.b16 %v344, %v343
    %v350 = vpack.c.b16 %v346, %v345
    %v356 = vsel %vm287, %v244, 0
    %358 = vmatprep.subr.bf16.mxu0 0
    %359 = vmatpush1.bf16.msra.mxu0 %v347
    %360 = vmatprep.subr.bf16.mxu0 0
    %361 = vmatpush1.bf16.msra.mxu0 %v348
    %362 = vmatprep.subr.bf16.mxu0 0
    %363 = vmatpush1.bf16.msra.mxu0 %v349
    %364 = vmatprep.subr.bf16.mxu0 0
    %365 = vmatpush1.bf16.msra.mxu0 %v350
    %366 = vmatprep.subr.bf16.mxu0 0
    %367 = vmatpush1.bf16.msra.mxu0 0
    %368 = vmatprep.subr.bf16.mxu0 0
    %369 = vmatpush1.bf16.msra.mxu0 0
    %370 = vmatprep.subr.bf16.mxu0 0
    %371 = vmatpush1.bf16.msra.mxu0 0
    %372 = vmatprep.subr.bf16.mxu0 0
    %373 = vmatpush1.bf16.msra.mxu0 0
    %374 = vmatprep.subr.bf16.mxu0 0
    %375 = vmatpush1.bf16.msra.mxu0 0
    %376 = vmatprep.subr.bf16.mxu0 0
    %377 = vmatpush1.bf16.msra.mxu0 0
    %378 = vmatprep.subr.bf16.mxu0 0
    %379 = vmatpush1.bf16.msra.mxu0 0
    %380 = vmatprep.subr.bf16.mxu0 0
    %381 = vmatpush1.bf16.msra.mxu0 0
    %382 = vmatprep.subr.bf16.mxu0 0
    %383 = vmatpush1.bf16.msra.mxu0 0
    %384 = vmatprep.subr.bf16.mxu0 0
    %385 = vmatpush1.bf16.msra.mxu0 0
    %386 = vmatprep.subr.bf16.mxu0 0
    %387 = vmatpush1.bf16.msra.mxu0 0
    %388 = vmatprep.subr.bf16.mxu0 0
    %389 = vmatpush1.bf16.msra.mxu0 0
    %390 = vmatprep.mubr.bf16.mxu0 0
    %391 = vmatmul.mubr.bf16.gmra.mrb[0].mxu0 %v356
    %v392 = vpop.f32.mrb[0].mxu0
    %v393 = vadd.f32 %v326, %v392
    %v394 = vpop.f32.mrb[0].mxu0
    %v395 = vpop.f32.mrb[0].mxu0
    %v396 = vpop.f32.mrb[0].mxu0
    %397 = vdwg.mxu0
    %v398 = vpack.c.bf16 %v238, %v238
    %s399 = scalar_lea.vmem %s3, 64
    %v400 = vld [vmem:[%s399] sm:$0xf]
    %v401 = vld [vmem:[%s399 + $0x4] sm:$0xf]
    %v402 = vld [vmem:[%s399 + $0x8] sm:$0xf]
    %v403 = vld [vmem:[%s399 + $0xc] sm:$0xf]
    %v404 = vld [vmem:[%s399 + $0x10] sm:$0xf]
    %v405 = vld [vmem:[%s399 + $0x14] sm:$0xf]
    %v406 = vld [vmem:[%s399 + $0x18] sm:$0xf]
    %v407 = vld [vmem:[%s399 + $0x1c] sm:$0xf]
    %v416 = vunpack.c.l.b16 %v400
    %v417 = vunpack.c.l.b16 %v401
    %v418 = vunpack.c.l.b16 %v402
    %v419 = vunpack.c.l.b16 %v403
    %v420 = vunpack.c.l.b16 %v404
    %v421 = vunpack.c.l.b16 %v405
    %v422 = vunpack.c.l.b16 %v406
    %v423 = vunpack.c.l.b16 %v407
    %v424 = vpack.c.b16 %v417, %v416
    %v425 = vpack.c.b16 %v419, %v418
    %v426 = vpack.c.b16 %v421, %v420
    %v427 = vpack.c.b16 %v423, %v422
    %v433 = vsel %vm287, %v398, 0
    %435 = vmatprep.subr.bf16.mxu0 0
    %436 = vmatpush1.bf16.msra.mxu0 %v424
    %437 = vmatprep.subr.bf16.mxu0 0
    %438 = vmatpush1.bf16.msra.mxu0 %v425
    %439 = vmatprep.subr.bf16.mxu0 0
    %440 = vmatpush1.bf16.msra.mxu0 %v426
    %441 = vmatprep.subr.bf16.mxu0 0
    %442 = vmatpush1.bf16.msra.mxu0 %v427
    %443 = vmatprep.subr.bf16.mxu0 0
    %444 = vmatpush1.bf16.msra.mxu0 0
    %445 = vmatprep.subr.bf16.mxu0 0
    %446 = vmatpush1.bf16.msra.mxu0 0
    %447 = vmatprep.subr.bf16.mxu0 0
    %448 = vmatpush1.bf16.msra.mxu0 0
    %449 = vmatprep.subr.bf16.mxu0 0
    %450 = vmatpush1.bf16.msra.mxu0 0
    %451 = vmatprep.subr.bf16.mxu0 0
    %452 = vmatpush1.bf16.msra.mxu0 0
    %453 = vmatprep.subr.bf16.mxu0 0
    %454 = vmatpush1.bf16.msra.mxu0 0
    %455 = vmatprep.subr.bf16.mxu0 0
    %456 = vmatpush1.bf16.msra.mxu0 0
    %457 = vmatprep.subr.bf16.mxu0 0
    %458 = vmatpush1.bf16.msra.mxu0 0
    %459 = vmatprep.subr.bf16.mxu0 0
    %460 = vmatpush1.bf16.msra.mxu0 0
    %461 = vmatprep.subr.bf16.mxu0 0
    %462 = vmatpush1.bf16.msra.mxu0 0
    %463 = vmatprep.subr.bf16.mxu0 0
    %464 = vmatpush1.bf16.msra.mxu0 0
    %465 = vmatprep.subr.bf16.mxu0 0
    %466 = vmatpush1.bf16.msra.mxu0 0
    %467 = vmatprep.mubr.bf16.mxu0 0
    %468 = vmatmul.mubr.bf16.gmra.mrb[0].mxu0 %v433
    %v469 = vpop.f32.mrb[0].mxu0
    %v470 = vadd.f32 0.0, %v469
    %v471 = vpop.f32.mrb[0].mxu0
    %v472 = vpop.f32.mrb[0].mxu0
    %v473 = vpop.f32.mrb[0].mxu0
    %474 = vdwg.mxu0
    %v475 = vadd.f32 %v393, %v470
    %v476 = vpack.c.bf16 %v239, %v239
    %s477 = scalar_lea.vmem %s3, 96
    %v478 = vld [vmem:[%s477] sm:$0xf]
    %v479 = vld [vmem:[%s477 + $0x4] sm:$0xf]
    %v480 = vld [vmem:[%s477 + $0x8] sm:$0xf]
    %v481 = vld [vmem:[%s477 + $0xc] sm:$0xf]
    %v482 = vld [vmem:[%s477 + $0x10] sm:$0xf]
    %v483 = vld [vmem:[%s477 + $0x14] sm:$0xf]
    %v484 = vld [vmem:[%s477 + $0x18] sm:$0xf]
    %v485 = vld [vmem:[%s477 + $0x1c] sm:$0xf]
    %v494 = vunpack.c.l.b16 %v478
    %v495 = vunpack.c.l.b16 %v479
    %v496 = vunpack.c.l.b16 %v480
    %v497 = vunpack.c.l.b16 %v481
    %v498 = vunpack.c.l.b16 %v482
    %v499 = vunpack.c.l.b16 %v483
    %v500 = vunpack.c.l.b16 %v484
    %v501 = vunpack.c.l.b16 %v485
    %v502 = vpack.c.b16 %v495, %v494
    %v503 = vpack.c.b16 %v497, %v496
    %v504 = vpack.c.b16 %v499, %v498
    %v505 = vpack.c.b16 %v501, %v500
    %v511 = vsel %vm287, %v476, 0
    %513 = vmatprep.subr.bf16.mxu0 0
    %514 = vmatpush1.bf16.msra.mxu0 %v502
    %515 = vmatprep.subr.bf16.mxu0 0
    %516 = vmatpush1.bf16.msra.mxu0 %v503
    %517 = vmatprep.subr.bf16.mxu0 0
    %518 = vmatpush1.bf16.msra.mxu0 %v504
    %519 = vmatprep.subr.bf16.mxu0 0
    %520 = vmatpush1.bf16.msra.mxu0 %v505
    %521 = vmatprep.subr.bf16.mxu0 0
    %522 = vmatpush1.bf16.msra.mxu0 0
    %523 = vmatprep.subr.bf16.mxu0 0
    %524 = vmatpush1.bf16.msra.mxu0 0
    %525 = vmatprep.subr.bf16.mxu0 0
    %526 = vmatpush1.bf16.msra.mxu0 0
    %527 = vmatprep.subr.bf16.mxu0 0
    %528 = vmatpush1.bf16.msra.mxu0 0
    %529 = vmatprep.subr.bf16.mxu0 0
    %530 = vmatpush1.bf16.msra.mxu0 0
    %531 = vmatprep.subr.bf16.mxu0 0
    %532 = vmatpush1.bf16.msra.mxu0 0
    %533 = vmatprep.subr.bf16.mxu0 0
    %534 = vmatpush1.bf16.msra.mxu0 0
    %535 = vmatprep.subr.bf16.mxu0 0
    %536 = vmatpush1.bf16.msra.mxu0 0
    %537 = vmatprep.subr.bf16.mxu0 0
    %538 = vmatpush1.bf16.msra.mxu0 0
    %539 = vmatprep.subr.bf16.mxu0 0
    %540 = vmatpush1.bf16.msra.mxu0 0
    %541 = vmatprep.subr.bf16.mxu0 0
    %542 = vmatpush1.bf16.msra.mxu0 0
    %543 = vmatprep.subr.bf16.mxu0 0
    %544 = vmatpush1.bf16.msra.mxu0 0
    %545 = vmatprep.mubr.bf16.mxu0 0
    %546 = vmatmul.mubr.bf16.gmra.mrb[0].mxu0 %v511
    %v547 = vpop.f32.mrb[0].mxu0
    %v548 = vadd.f32 0.0, %v547
    %v549 = vpop.f32.mrb[0].mxu0
    %v550 = vpop.f32.mrb[0].mxu0
    %v551 = vpop.f32.mrb[0].mxu0
    %552 = vdwg.mxu0
    %v553 = vadd.f32 %v475, %v548
    %v554 = vpack.c.bf16 %v240, %v240
    %s555 = scalar_lea.vmem %s3, 128
    %v556 = vld [vmem:[%s555] sm:$0xf]
    %v557 = vld [vmem:[%s555 + $0x4] sm:$0xf]
    %v558 = vld [vmem:[%s555 + $0x8] sm:$0xf]
    %v559 = vld [vmem:[%s555 + $0xc] sm:$0xf]
    %v560 = vld [vmem:[%s555 + $0x10] sm:$0xf]
    %v561 = vld [vmem:[%s555 + $0x14] sm:$0xf]
    %v562 = vld [vmem:[%s555 + $0x18] sm:$0xf]
    %v563 = vld [vmem:[%s555 + $0x1c] sm:$0xf]
    %v572 = vunpack.c.l.b16 %v556
    %v573 = vunpack.c.l.b16 %v557
    %v574 = vunpack.c.l.b16 %v558
    %v575 = vunpack.c.l.b16 %v559
    %v576 = vunpack.c.l.b16 %v560
    %v577 = vunpack.c.l.b16 %v561
    %v578 = vunpack.c.l.b16 %v562
    %v579 = vunpack.c.l.b16 %v563
    %v580 = vpack.c.b16 %v573, %v572
    %v581 = vpack.c.b16 %v575, %v574
    %v582 = vpack.c.b16 %v577, %v576
    %v583 = vpack.c.b16 %v579, %v578
    %v589 = vsel %vm287, %v554, 0
    %591 = vmatprep.subr.bf16.mxu0 0
    %592 = vmatpush1.bf16.msra.mxu0 %v580
    %593 = vmatprep.subr.bf16.mxu0 0
    %594 = vmatpush1.bf16.msra.mxu0 %v581
    %595 = vmatprep.subr.bf16.mxu0 0
    %596 = vmatpush1.bf16.msra.mxu0 %v582
    %597 = vmatprep.subr.bf16.mxu0 0
    %598 = vmatpush1.bf16.msra.mxu0 %v583
    %599 = vmatprep.subr.bf16.mxu0 0
    %600 = vmatpush1.bf16.msra.mxu0 0
    %601 = vmatprep.subr.bf16.mxu0 0
    %602 = vmatpush1.bf16.msra.mxu0 0
    %603 = vmatprep.subr.bf16.mxu0 0
    %604 = vmatpush1.bf16.msra.mxu0 0
    %605 = vmatprep.subr.bf16.mxu0 0
    %606 = vmatpush1.bf16.msra.mxu0 0
    %607 = vmatprep.subr.bf16.mxu0 0
    %608 = vmatpush1.bf16.msra.mxu0 0
    %609 = vmatprep.subr.bf16.mxu0 0
    %610 = vmatpush1.bf16.msra.mxu0 0
    %611 = vmatprep.subr.bf16.mxu0 0
    %612 = vmatpush1.bf16.msra.mxu0 0
    %613 = vmatprep.subr.bf16.mxu0 0
    %614 = vmatpush1.bf16.msra.mxu0 0
    %615 = vmatprep.subr.bf16.mxu0 0
    %616 = vmatpush1.bf16.msra.mxu0 0
    %617 = vmatprep.subr.bf16.mxu0 0
    %618 = vmatpush1.bf16.msra.mxu0 0
    %619 = vmatprep.subr.bf16.mxu0 0
    %620 = vmatpush1.bf16.msra.mxu0 0
    %621 = vmatprep.subr.bf16.mxu0 0
    %622 = vmatpush1.bf16.msra.mxu0 0
    %623 = vmatprep.mubr.bf16.mxu0 0
    %624 = vmatmul.mubr.bf16.gmra.mrb[0].mxu0 %v589
    %v625 = vpop.f32.mrb[0].mxu0
    %v626 = vadd.f32 0.0, %v625
    %v627 = vpop.f32.mrb[0].mxu0
    %v628 = vpop.f32.mrb[0].mxu0
    %v629 = vpop.f32.mrb[0].mxu0
    %630 = vdwg.mxu0
    %v631 = vadd.f32 %v553, %v626
    %v632 = vpack.c.bf16 %v241, %v241
    %s633 = scalar_lea.vmem %s3, 160
    %v634 = vld [vmem:[%s633] sm:$0xf]
    %v635 = vld [vmem:[%s633 + $0x4] sm:$0xf]
    %v636 = vld [vmem:[%s633 + $0x8] sm:$0xf]
    %v637 = vld [vmem:[%s633 + $0xc] sm:$0xf]
    %v638 = vld [vmem:[%s633 + $0x10] sm:$0xf]
    %v639 = vld [vmem:[%s633 + $0x14] sm:$0xf]
    %v640 = vld [vmem:[%s633 + $0x18] sm:$0xf]
    %v641 = vld [vmem:[%s633 + $0x1c] sm:$0xf]
    %v650 = vunpack.c.l.b16 %v634
    %v651 = vunpack.c.l.b16 %v635
    %v652 = vunpack.c.l.b16 %v636
    %v653 = vunpack.c.l.b16 %v637
    %v654 = vunpack.c.l.b16 %v638
    %v655 = vunpack.c.l.b16 %v639
    %v656 = vunpack.c.l.b16 %v640
    %v657 = vunpack.c.l.b16 %v641
    %v658 = vpack.c.b16 %v651, %v650
    %v659 = vpack.c.b16 %v653, %v652
    %v660 = vpack.c.b16 %v655, %v654
    %v661 = vpack.c.b16 %v657, %v656
    %v667 = vsel %vm287, %v632, 0
    %669 = vmatprep.subr.bf16.mxu0 0
    %670 = vmatpush1.bf16.msra.mxu0 %v658
    %671 = vmatprep.subr.bf16.mxu0 0
    %672 = vmatpush1.bf16.msra.mxu0 %v659
    %673 = vmatprep.subr.bf16.mxu0 0
    %674 = vmatpush1.bf16.msra.mxu0 %v660
    %675 = vmatprep.subr.bf16.mxu0 0
    %676 = vmatpush1.bf16.msra.mxu0 %v661
    %677 = vmatprep.subr.bf16.mxu0 0
    %678 = vmatpush1.bf16.msra.mxu0 0
    %679 = vmatprep.subr.bf16.mxu0 0
    %680 = vmatpush1.bf16.msra.mxu0 0
    %681 = vmatprep.subr.bf16.mxu0 0
    %682 = vmatpush1.bf16.msra.mxu0 0
    %683 = vmatprep.subr.bf16.mxu0 0
    %684 = vmatpush1.bf16.msra.mxu0 0
    %685 = vmatprep.subr.bf16.mxu0 0
    %686 = vmatpush1.bf16.msra.mxu0 0
    %687 = vmatprep.subr.bf16.mxu0 0
    %688 = vmatpush1.bf16.msra.mxu0 0
    %689 = vmatprep.subr.bf16.mxu0 0
    %690 = vmatpush1.bf16.msra.mxu0 0
    %691 = vmatprep.subr.bf16.mxu0 0
    %692 = vmatpush1.bf16.msra.mxu0 0
    %693 = vmatprep.subr.bf16.mxu0 0
    %694 = vmatpush1.bf16.msra.mxu0 0
    %695 = vmatprep.subr.bf16.mxu0 0
    %696 = vmatpush1.bf16.msra.mxu0 0
    %697 = vmatprep.subr.bf16.mxu0 0
    %698 = vmatpush1.bf16.msra.mxu0 0
    %699 = vmatprep.subr.bf16.mxu0 0
    %700 = vmatpush1.bf16.msra.mxu0 0
    %701 = vmatprep.mubr.bf16.mxu0 0
    %702 = vmatmul.mubr.bf16.gmra.mrb[0].mxu0 %v667
    %v703 = vpop.f32.mrb[0].mxu0
    %v704 = vadd.f32 0.0, %v703
    %v705 = vpop.f32.mrb[0].mxu0
    %v706 = vpop.f32.mrb[0].mxu0
    %v707 = vpop.f32.mrb[0].mxu0
    %708 = vdwg.mxu0
    %v709 = vadd.f32 %v631, %v704
    %v710 = vpack.c.bf16 %v242, %v242
    %s711 = scalar_lea.vmem %s3, 192
    %v712 = vld [vmem:[%s711] sm:$0xf]
    %v713 = vld [vmem:[%s711 + $0x4] sm:$0xf]
    %v714 = vld [vmem:[%s711 + $0x8] sm:$0xf]
    %v715 = vld [vmem:[%s711 + $0xc] sm:$0xf]
    %v716 = vld [vmem:[%s711 + $0x10] sm:$0xf]
    %v717 = vld [vmem:[%s711 + $0x14] sm:$0xf]
    %v718 = vld [vmem:[%s711 + $0x18] sm:$0xf]
    %v719 = vld [vmem:[%s711 + $0x1c] sm:$0xf]
    %v728 = vunpack.c.l.b16 %v712
    %v729 = vunpack.c.l.b16 %v713
    %v730 = vunpack.c.l.b16 %v714
    %v731 = vunpack.c.l.b16 %v715
    %v732 = vunpack.c.l.b16 %v716
    %v733 = vunpack.c.l.b16 %v717
    %v734 = vunpack.c.l.b16 %v718
    %v735 = vunpack.c.l.b16 %v719
    %v736 = vpack.c.b16 %v729, %v728
    %v737 = vpack.c.b16 %v731, %v730
    %v738 = vpack.c.b16 %v733, %v732
    %v739 = vpack.c.b16 %v735, %v734
    %v745 = vsel %vm287, %v710, 0
    %747 = vmatprep.subr.bf16.mxu0 0
    %748 = vmatpush1.bf16.msra.mxu0 %v736
    %749 = vmatprep.subr.bf16.mxu0 0
    %750 = vmatpush1.bf16.msra.mxu0 %v737
    %751 = vmatprep.subr.bf16.mxu0 0
    %752 = vmatpush1.bf16.msra.mxu0 %v738
    %753 = vmatprep.subr.bf16.mxu0 0
    %754 = vmatpush1.bf16.msra.mxu0 %v739
    %755 = vmatprep.subr.bf16.mxu0 0
    %756 = vmatpush1.bf16.msra.mxu0 0
    %757 = vmatprep.subr.bf16.mxu0 0
    %758 = vmatpush1.bf16.msra.mxu0 0
    %759 = vmatprep.subr.bf16.mxu0 0
    %760 = vmatpush1.bf16.msra.mxu0 0
    %761 = vmatprep.subr.bf16.mxu0 0
    %762 = vmatpush1.bf16.msra.mxu0 0
    %763 = vmatprep.subr.bf16.mxu0 0
    %764 = vmatpush1.bf16.msra.mxu0 0
    %765 = vmatprep.subr.bf16.mxu0 0
    %766 = vmatpush1.bf16.msra.mxu0 0
    %767 = vmatprep.subr.bf16.mxu0 0
    %768 = vmatpush1.bf16.msra.mxu0 0
    %769 = vmatprep.subr.bf16.mxu0 0
    %770 = vmatpush1.bf16.msra.mxu0 0
    %771 = vmatprep.subr.bf16.mxu0 0
    %772 = vmatpush1.bf16.msra.mxu0 0
    %773 = vmatprep.subr.bf16.mxu0 0
    %774 = vmatpush1.bf16.msra.mxu0 0
    %775 = vmatprep.subr.bf16.mxu0 0
    %776 = vmatpush1.bf16.msra.mxu0 0
    %777 = vmatprep.subr.bf16.mxu0 0
    %778 = vmatpush1.bf16.msra.mxu0 0
    %779 = vmatprep.mubr.bf16.mxu0 0
    %780 = vmatmul.mubr.bf16.gmra.mrb[0].mxu0 %v745
    %v781 = vpop.f32.mrb[0].mxu0
    %v782 = vadd.f32 0.0, %v781
    %v783 = vpop.f32.mrb[0].mxu0
    %v784 = vpop.f32.mrb[0].mxu0
    %v785 = vpop.f32.mrb[0].mxu0
    %786 = vdwg.mxu0
    %v787 = vadd.f32 %v709, %v782
    %v788 = vpack.c.bf16 %v243, %v243
    %s789 = scalar_lea.vmem %s3, 224
    %v790 = vld [vmem:[%s789] sm:$0xf]
    %v791 = vld [vmem:[%s789 + $0x4] sm:$0xf]
    %v792 = vld [vmem:[%s789 + $0x8] sm:$0xf]
    %v793 = vld [vmem:[%s789 + $0xc] sm:$0xf]
    %v794 = vld [vmem:[%s789 + $0x10] sm:$0xf]
    %v795 = vld [vmem:[%s789 + $0x14] sm:$0xf]
    %v796 = vld [vmem:[%s789 + $0x18] sm:$0xf]
    %v797 = vld [vmem:[%s789 + $0x1c] sm:$0xf]
    %v806 = vunpack.c.l.b16 %v790
    %v807 = vunpack.c.l.b16 %v791
    %v808 = vunpack.c.l.b16 %v792
    %v809 = vunpack.c.l.b16 %v793
    %v810 = vunpack.c.l.b16 %v794
    %v811 = vunpack.c.l.b16 %v795
    %v812 = vunpack.c.l.b16 %v796
    %v813 = vunpack.c.l.b16 %v797
    %v814 = vpack.c.b16 %v807, %v806
    %v815 = vpack.c.b16 %v809, %v808
    %v816 = vpack.c.b16 %v811, %v810
    %v817 = vpack.c.b16 %v813, %v812
    %v823 = vsel %vm287, %v788, 0
    %825 = vmatprep.subr.bf16.mxu0 0
    %826 = vmatpush1.bf16.msra.mxu0 %v814
    %827 = vmatprep.subr.bf16.mxu0 0
    %828 = vmatpush1.bf16.msra.mxu0 %v815
    %829 = vmatprep.subr.bf16.mxu0 0
    %830 = vmatpush1.bf16.msra.mxu0 %v816
    %831 = vmatprep.subr.bf16.mxu0 0
    %832 = vmatpush1.bf16.msra.mxu0 %v817
    %833 = vmatprep.subr.bf16.mxu0 0
    %834 = vmatpush1.bf16.msra.mxu0 0
    %835 = vmatprep.subr.bf16.mxu0 0
    %836 = vmatpush1.bf16.msra.mxu0 0
    %837 = vmatprep.subr.bf16.mxu0 0
    %838 = vmatpush1.bf16.msra.mxu0 0
    %839 = vmatprep.subr.bf16.mxu0 0
    %840 = vmatpush1.bf16.msra.mxu0 0
    %841 = vmatprep.subr.bf16.mxu0 0
    %842 = vmatpush1.bf16.msra.mxu0 0
    %843 = vmatprep.subr.bf16.mxu0 0
    %844 = vmatpush1.bf16.msra.mxu0 0
    %845 = vmatprep.subr.bf16.mxu0 0
    %846 = vmatpush1.bf16.msra.mxu0 0
    %847 = vmatprep.subr.bf16.mxu0 0
    %848 = vmatpush1.bf16.msra.mxu0 0
    %849 = vmatprep.subr.bf16.mxu0 0
    %850 = vmatpush1.bf16.msra.mxu0 0
    %851 = vmatprep.subr.bf16.mxu0 0
    %852 = vmatpush1.bf16.msra.mxu0 0
    %853 = vmatprep.subr.bf16.mxu0 0
    %854 = vmatpush1.bf16.msra.mxu0 0
    %855 = vmatprep.subr.bf16.mxu0 0
    %856 = vmatpush1.bf16.msra.mxu0 0
    %857 = vmatprep.mubr.bf16.mxu0 0
    %858 = vmatmul.mubr.bf16.gmra.mrb[0].mxu0 %v823
    %v859 = vpop.f32.mrb[0].mxu0
    %v860 = vadd.f32 0.0, %v859
    %v861 = vpop.f32.mrb[0].mxu0
    %v862 = vpop.f32.mrb[0].mxu0
    %v863 = vpop.f32.mrb[0].mxu0
    %864 = vdwg.mxu0
    %v865 = vadd.f32 %v787, %v860
    %v866 = vld [vmem:[%s4] sm:$0x1]
    %v868 = vlaneseq
    %v869 = vshrl.u32 %v868, 7
    %v870 = vsub.s32 0, %v869
    %v871 = vrot.slane %v866, %v870
    %v873 = vadd.f32 %v865, %v871
    %vm874 = vcmask 254976
    %875 = vst.msk [vmem:[%s6] sm:$0x3] %vm874, %v873
    %v876 = vmul.f32 %v873, 0.5
    %v877 = vmul.f32 %v876, 1.442695
    %v878 = vpow.pop %v877
    %v879 = vld [vmem:[%s5] sm:$0x3]
    %881 = vrot.lane.b32.xlu0 %v879, 16
    %v882 = vpop.permute.xlu0 %881
    %v884 = vmul.f32 %v878, %v882
    %886 = vrot.lane.b32.xlu0 %v884, 112
    %v887 = vpop.permute.xlu0 %886
    %v889 = vadd.f32 %v873, %v887
    %vm890 = vcmask 123904
    %891 = vst.msk [vmem:[#allocation2] sm:$0x3] %vm890, %v889
    // Predicated region
    $region26: #{image_encoder_forward.1} parent=1 // pred_check
      _
    $region27: #{image_encoder_forward.1} parent=1 // pred_check_branch
      %893 = sbr.rel (0) target = $region29
    $region28: #{image_encoder_forward.1} parent=1 // pred_region
      _
    $region29: #{image_encoder_forward.1} parent=1 // pred_fallthru
      _
    // Predicated region
    $region30: #{image_encoder_forward.1} parent=1 // pred_check
      _
    $region31: #{image_encoder_forward.1} parent=1 // pred_check_branch
      %895 = sbr.rel (0) target = $region33
    $region32: #{image_encoder_forward.1} parent=1 // pred_region
      %s897 = ssub.s32 32, 32
      %898 = vsyncadd [#allocation3], %s897
      %s900 = sshll.u32 [#allocation2], 4
      %s901 = int_to_ptr.vmem [resolvable:$true] %s900
      %903 = dma.vmem_to_hbm [thread:$0]  %s901, 32, %s7, [#allocation3]
    $region33: #{image_encoder_forward.1} parent=1 // pred_fallthru
      _
    // Predicated region
    $region34: #{image_encoder_forward.1} parent=1 // pred_check
      _
    $region35: #{image_encoder_forward.1} parent=1 // pred_check_branch
      %905 = sbr.rel (0) target = $region37
    $region36: #{image_encoder_forward.1} parent=1 // pred_region
      _
    $region37: #{image_encoder_forward.1} parent=1 // pred_fallthru
      _
    // Predicated region
    $region38: #{image_encoder_forward.1} parent=1 // pred_check
      _
    $region39: #{image_encoder_forward.1} parent=1 // pred_check_branch
      %907 = sbr.rel (0) target = $region41
    $region40: #{image_encoder_forward.1} parent=1 // pred_region
      %908 = dma.done [#allocation3], 32
    $region41: #{image_encoder_forward.1} parent=1 // pred_fallthru
      _
    %909 = vsyncpa [#allocation3], 1

</llo_original>
